<compile_context>
chip_gen: v7x
topology: tpu7x:2x2x1
jax: 0.10.0
libtpu: 0.0.40
codegen_flags: <defaults>
</compile_context>

<pallas_src>
import jax
import jax.numpy as jnp
from jax.experimental import pallas as pl
from jax.experimental.pallas import tpu as pltpu


def _round_up(v, m):
    return ((v + m - 1) // m) * m


def _make_fused_kernel(n_layers, cins, cout_p, H, W, HW, PAD, SEXT, C_MAX,
                       compute_dtype):
    """Builds the fused n-layer conv3x3+ReLU kernel body (one sample/step)."""
    taps = [(dy, dx) for dy in (-1, 0, 1) for dx in (-1, 0, 1)]

    def kernel(*refs):
        x_ref = refs[0]
        layer_refs = refs[1:1 + 2 * n_layers]
        o_ref = refs[1 + 2 * n_layers]
        act = refs[2 + 2 * n_layers]          # (C_MAX, SEXT) f32 guarded acts

        # Zero ONLY the guard bands (front PAD lanes, back SEXT-PAD-HW lanes);
        # the data region [PAD, PAD+HW) is fully overwritten below.  The
        # guards realize the conv's zero padding for the vertical taps.
        act[:, 0:PAD] = jnp.zeros((C_MAX, PAD), jnp.float32)
        act[:, PAD + HW:SEXT] = jnp.zeros((C_MAX, SEXT - PAD - HW), jnp.float32)

        # Stage the (spatially flattened) input at the lane-aligned offset.
        act[0:cins[0], PAD:PAD + HW] = x_ref[0, :, :]

        # Hoisted column-validity masks for the horizontal taps; exact-shape
        # operands so jnp.where never broadcasts inside the tap loop.
        masks = {}
        for c in set(cins):
            col = jax.lax.broadcasted_iota(jnp.int32, (c, HW), 1) % W
            masks[c] = (col >= 1,          # dx = -1 reads x-1 (invalid at x=0)
                        col <= W - 2)      # dx = +1 reads x+1 (invalid at x=W-1)

        out = None
        for layer in range(n_layers):
            cin = cins[layer]
            w_ref = layer_refs[2 * layer]       # (cout_p, 9*cin) compute_dtype
            b_ref = layer_refs[2 * layer + 1]   # (cout_p, 1)     f32
            m_left, m_right = masks[cin]

            # One aligned load of the whole guarded slab (cin, SEXT).
            slab = act[0:cin, :]

            # Build the nine tap slabs in registers: XLU lane-rotate + fixed
            # lane-aligned window.  The [PAD:PAD+HW) window never wraps
            # because both guard bands are >= W+1 wide.
            tap_slabs = []
            for (dy, dx) in taps:
                d = dy * W + dx
                if d == 0:
                    t = slab[:, PAD:PAD + HW]
                else:
                    t = pltpu.roll(slab, shift=(-d) % SEXT, axis=1)[:, PAD:PAD + HW]
                if dx == -1:
                    t = jnp.where(m_left, t, 0.0)
                elif dx == 1:
                    t = jnp.where(m_right, t, 0.0)
                tap_slabs.append(t)

            # (9*cin, HW) patch matrix lives only in registers; tap blocks are
            # 8-row (f32 tile) aligned, so the concat is exact-tile work.
            patches = jnp.concatenate(tap_slabs, axis=0).astype(compute_dtype)

            # Single big-K MXU matmul, f32 accumulation; bias + ReLU in f32.
            out = jnp.dot(w_ref[...], patches, preferred_element_type=jnp.float32)
            out = jnp.maximum(out + b_ref[...], 0.0)

            # Hand the activation to the next layer (stays in VMEM, aligned).
            if layer < n_layers - 1:
                act[0:cout_p, PAD:PAD + HW] = out

        # Lane-dense output store (last dim HW is a multiple of 128 here).
        o_ref[0, :, :] = out.astype(o_ref.dtype)

    return kernel


def restore_net_block_forward(x_nchw, params, compute_dtype=jnp.bfloat16):
    """Forward pass matching RestoreNetBlock.forward. Input/output NCHW f32.

    params: list of (weight OIHW (out_c, in_c, 3, 3) f32, bias (out_c,) f32).
    """
    x = x_nchw.astype(jnp.float32)
    B, in_c, H, W = x.shape
    HW = H * W
    n_layers = len(params)
    out_c = params[0][0].shape[0]

    # Channel padding to multiples of 8 -> uniform, sublane-aligned tap blocks.
    cin0_p = _round_up(in_c, 8)
    cout_p = _round_up(out_c, 8)
    C_MAX = max(cin0_p, cout_p)

    # Front guard = 128 lanes (lane-aligned, >= W+1); back guard >= W+1.
    PAD = _round_up(max(W + 2, 128), 128)
    SEXT = _round_up(PAD + HW + W + 1, 128)
    assert PAD >= W + 1, "front guard must cover the largest negative tap"
    assert SEXT - PAD - HW >= W + 1, "back guard must cover the largest positive tap"

    # Host-side prep: flatten spatial dims, zero-pad channels, flatten weights
    # to (cout_p, 9*cin_p) matching the im2col row order (tap-major, cin-minor).
    x_flat = jnp.pad(x.reshape(B, in_c, HW), ((0, 0), (0, cin0_p - in_c), (0, 0)))

    flat_params = []
    in_specs = [pl.BlockSpec((1, cin0_p, HW), lambda i: (i, 0, 0))]
    cins = []
    c_in, c_in_p = in_c, cin0_p
    for (w, bias) in params:
        cins.append(c_in_p)
        w_p = jnp.pad(w, ((0, cout_p - out_c), (0, c_in_p - c_in), (0, 0), (0, 0)))
        w_flat = jnp.transpose(w_p, (0, 2, 3, 1)).reshape(cout_p, 9 * c_in_p)
        b_p = jnp.pad(bias, (0, cout_p - out_c)).reshape(cout_p, 1)
        flat_params.append(w_flat.astype(compute_dtype))
        flat_params.append(b_p.astype(jnp.float32))
        in_specs.append(pl.BlockSpec((cout_p, 9 * c_in_p), lambda i: (0, 0)))
        in_specs.append(pl.BlockSpec((cout_p, 1), lambda i: (0, 0)))
        c_in, c_in_p = out_c, cout_p

    kernel = _make_fused_kernel(n_layers, cins, cout_p, H, W, HW, PAD, SEXT,
                                C_MAX, compute_dtype)

    out_flat = pl.pallas_call(
        kernel,
        out_shape=jax.ShapeDtypeStruct((B, cout_p, HW), jnp.float32),
        grid_spec=pltpu.PrefetchScalarGridSpec(
            num_scalar_prefetch=0,
            grid=(B,),                        # one sample per step; >=2 steps
            in_specs=in_specs,                # keep both v7x TCs busy.
            out_specs=pl.BlockSpec((1, cout_p, HW), lambda i: (i, 0, 0)),
            scratch_shapes=[pltpu.VMEM((C_MAX, SEXT), jnp.float32)],
        ),
        compiler_params=pltpu.CompilerParams(
            dimension_semantics=("parallel",),
        ),
    )(x_flat, *flat_params)

    return out_flat[:, :out_c, :].reshape(B, out_c, H, W)


def init_restore_net_block_params(key, in_c, out_c, n=3):
    """Deterministic params mirroring nn.Conv2d default init (OIHW layout)."""
    params = []
    c_in = in_c
    for _ in range(n):
        key, kw, kb = jax.random.split(key, 3)
        fan_in = c_in * 3 * 3
        bound = 1.0 / jnp.sqrt(fan_in)
        w = jax.random.uniform(kw, (out_c, c_in, 3, 3), jnp.float32, -bound, bound)
        b = jax.random.uniform(kb, (out_c,), jnp.float32, -bound, bound)
        params.append((w, b))
        c_in = out_c
    return params


def _reference_forward(x_nchw, params):
    """Pure-JAX reference identical to the PyTorch module (f32)."""
    y = x_nchw.astype(jnp.float32)
    for w, b in params:
        y = jax.lax.conv_general_dilated(
            y, w, window_strides=(1, 1), padding=((1, 1), (1, 1)),
            dimension_numbers=("NCHW", "OIHW", "NCHW"))
        y = jnp.maximum(y + b[None, :, None, None], 0.0)
    return y


if __name__ == "__main__":
    key = jax.random.PRNGKey(0)
    k_x, k_p = jax.random.split(key)

    B, in_c, out_c, H, W = 2, 4, 8, 16, 16
    x = jax.random.normal(k_x, (B, in_c, H, W), dtype=jnp.float32)
    params = init_restore_net_block_params(k_p, in_c, out_c, n=3)

    fwd = jax.jit(lambda xx: restore_net_block_forward(xx, params))
    out = jax.block_until_ready(fwd(x))

    ref = jax.block_until_ready(_reference_forward(x, params))

    assert out.shape == (B, out_c, H, W), out.shape
    assert bool(jnp.all(out >= 0.0)), "ReLU output must be non-negative"
    max_err = float(jnp.max(jnp.abs(out - ref)))
    assert max_err < 5e-2, f"mismatch vs reference: max abs err {max_err}"
    print("KERNEL_OK")
</pallas_src>

<mosaic_0001>
module attributes {stable_mosaic.version = 11 : i64} {
  func.func @kernel(%arg0: i32, %arg1: memref<1x8x256xf32, #tpu.memory_space<vmem>>, %arg2: memref<8x72xbf16, #tpu.memory_space<vmem>>, %arg3: memref<8x1xf32, #tpu.memory_space<vmem>>, %arg4: memref<8x72xbf16, #tpu.memory_space<vmem>>, %arg5: memref<8x1xf32, #tpu.memory_space<vmem>>, %arg6: memref<8x72xbf16, #tpu.memory_space<vmem>>, %arg7: memref<8x1xf32, #tpu.memory_space<vmem>>, %arg8: memref<1x8x256xf32, #tpu.memory_space<vmem>>, %arg9: memref<8x512xf32, #tpu.memory_space<vmem>>) attributes {dimension_semantics = [#tpu.dimension_semantics<parallel>], iteration_bounds = array<i64: 2>, scalar_prefetch = 0 : i64, scratch_operands = 1 : i64, tpu.core_type = #tpu.core_type<tc>, window_params = [{transform_indices = @transform_0, window_bounds = array<i64: 1, 8, 256>}, {pipeline_mode = #tpu.pipeline_mode<synchronous>, transform_indices = @transform_1, window_bounds = array<i64: 8, 72>}, {pipeline_mode = #tpu.pipeline_mode<synchronous>, transform_indices = @transform_2, window_bounds = array<i64: 8, 1>}, {pipeline_mode = #tpu.pipeline_mode<synchronous>, transform_indices = @transform_3, window_bounds = array<i64: 8, 72>}, {pipeline_mode = #tpu.pipeline_mode<synchronous>, transform_indices = @transform_4, window_bounds = array<i64: 8, 1>}, {pipeline_mode = #tpu.pipeline_mode<synchronous>, transform_indices = @transform_5, window_bounds = array<i64: 8, 72>}, {pipeline_mode = #tpu.pipeline_mode<synchronous>, transform_indices = @transform_6, window_bounds = array<i64: 8, 1>}, {transform_indices = @transform_7, window_bounds = array<i64: 1, 8, 256>}]} {
    %cst = arith.constant 0.000000e+00 : f32
    %0 = vector.broadcast %cst : f32 to vector<8x128xf32>
    %c0 = arith.constant 0 : index
    %c0_0 = arith.constant 0 : index
    %1 = vector.load %arg9[%c0, %c0_0] : memref<8x512xf32, #tpu.memory_space<vmem>>, vector<8x128xf32>
    tpu.vector_store %arg9[%c0, %c0_0], %0 {strides = array<i32>} : memref<8x512xf32, #tpu.memory_space<vmem>>, vector<8x128xf32>,
    %cst_1 = arith.constant 0.000000e+00 : f32
    %2 = vector.broadcast %cst_1 : f32 to vector<8x128xf32>
    %c0_2 = arith.constant 0 : index
    %c384 = arith.constant 384 : index
    %3 = vector.load %arg9[%c0_2, %c384] : memref<8x512xf32, #tpu.memory_space<vmem>>, vector<8x128xf32>
    tpu.vector_store %arg9[%c0_2, %c384], %2 {strides = array<i32>} : memref<8x512xf32, #tpu.memory_space<vmem>>, vector<8x128xf32>,
    %c0_3 = arith.constant 0 : index
    %c0_4 = arith.constant 0 : index
    %c0_5 = arith.constant 0 : index
    %4 = vector.load %arg1[%c0_3, %c0_4, %c0_5] : memref<1x8x256xf32, #tpu.memory_space<vmem>>, vector<1x8x256xf32>
    %5 = vector.shape_cast %4 : vector<1x8x256xf32> to vector<8x256xf32>
    %c0_6 = arith.constant 0 : index
    %c128 = arith.constant 128 : index
    %6 = vector.load %arg9[%c0_6, %c128] : memref<8x512xf32, #tpu.memory_space<vmem>>, vector<8x256xf32>
    tpu.vector_store %arg9[%c0_6, %c128], %5 {strides = array<i32>} : memref<8x512xf32, #tpu.memory_space<vmem>>, vector<8x256xf32>,
    %7 = tpu.iota {dimensions = array<i32: 1>} : vector<8x256xi32>
    %c16_i32 = arith.constant 16 : i32
    %c0_i32 = arith.constant 0 : i32
    %8 = arith.cmpi eq, %c16_i32, %c0_i32 : i32
    %c1_i32 = arith.constant 1 : i32
    %9 = arith.select %8, %c1_i32, %c16_i32 : i32
    %10 = vector.broadcast %9 : i32 to vector<8x256xi32>
    %11 = arith.remsi %7, %10 : vector<8x256xi32>
    %c0_i32_7 = arith.constant 0 : i32
    %12 = vector.broadcast %c0_i32_7 : i32 to vector<8x256xi32>
    %13 = arith.cmpi ne, %11, %12 : vector<8x256xi32>
    %c0_i32_8 = arith.constant 0 : i32
    %14 = vector.broadcast %c0_i32_8 : i32 to vector<8x256xi32>
    %15 = arith.cmpi slt, %11, %14 : vector<8x256xi32>
    %c0_i32_9 = arith.constant 0 : i32
    %16 = arith.cmpi slt, %9, %c0_i32_9 : i32
    %17 = vector.broadcast %16 : i1 to vector<8x256xi1>
    %18 = vector.broadcast %17 : vector<8x256xi1> to vector<8x256xi1>
    %19 = arith.xori %15, %18 : vector<8x256xi1>
    %20 = arith.andi %19, %13 : vector<8x256xi1>
    %21 = vector.broadcast %9 : i32 to vector<8x256xi32>
    %22 = arith.addi %11, %21 : vector<8x256xi32>
    %23 = arith.select %20, %22, %11 : vector<8x256xi1>, vector<8x256xi32>
    %c1_i32_10 = arith.constant 1 : i32
    %24 = vector.broadcast %c1_i32_10 : i32 to vector<8x256xi32>
    %25 = arith.cmpi sge, %23, %24 : vector<8x256xi32>
    %c14_i32 = arith.constant 14 : i32
    %26 = vector.broadcast %c14_i32 : i32 to vector<8x256xi32>
    %27 = arith.cmpi sle, %23, %26 : vector<8x256xi32>
    %c0_11 = arith.constant 0 : index
    %c0_12 = arith.constant 0 : index
    %28 = vector.load %arg9[%c0_11, %c0_12] : memref<8x512xf32, #tpu.memory_space<vmem>>, vector<8x512xf32>
    %c17_i32 = arith.constant 17 : i32
    %29 = tpu.dynamic_rotate %28 by %c17_i32 dim 1 : vector<8x512xf32>, i32 -> vector<8x512xf32>
    %30 = vector.extract_strided_slice %29 {offsets = [0, 128], sizes = [8, 256], strides = [1, 1]} : vector<8x512xf32> to vector<8x256xf32>
    %cst_13 = arith.constant 0.000000e+00 : f32
    %31 = vector.broadcast %cst_13 : f32 to vector<8x256xf32>
    %32 = arith.select %25, %30, %31 : vector<8x256xi1>, vector<8x256xf32>
    %c16_i32_14 = arith.constant 16 : i32
    %33 = tpu.dynamic_rotate %28 by %c16_i32_14 dim 1 : vector<8x512xf32>, i32 -> vector<8x512xf32>
    %34 = vector.extract_strided_slice %33 {offsets = [0, 128], sizes = [8, 256], strides = [1, 1]} : vector<8x512xf32> to vector<8x256xf32>
    %c15_i32 = arith.constant 15 : i32
    %35 = tpu.dynamic_rotate %28 by %c15_i32 dim 1 : vector<8x512xf32>, i32 -> vector<8x512xf32>
    %36 = vector.extract_strided_slice %35 {offsets = [0, 128], sizes = [8, 256], strides = [1, 1]} : vector<8x512xf32> to vector<8x256xf32>
    %cst_15 = arith.constant 0.000000e+00 : f32
    %37 = vector.broadcast %cst_15 : f32 to vector<8x256xf32>
    %38 = arith.select %27, %36, %37 : vector<8x256xi1>, vector<8x256xf32>
    %c1_i32_16 = arith.constant 1 : i32
    %39 = tpu.dynamic_rotate %28 by %c1_i32_16 dim 1 : vector<8x512xf32>, i32 -> vector<8x512xf32>
    %40 = vector.extract_strided_slice %39 {offsets = [0, 128], sizes = [8, 256], strides = [1, 1]} : vector<8x512xf32> to vector<8x256xf32>
    %cst_17 = arith.constant 0.000000e+00 : f32
    %41 = vector.broadcast %cst_17 : f32 to vector<8x256xf32>
    %42 = arith.select %25, %40, %41 : vector<8x256xi1>, vector<8x256xf32>
    %43 = vector.extract_strided_slice %28 {offsets = [0, 128], sizes = [8, 256], strides = [1, 1]} : vector<8x512xf32> to vector<8x256xf32>
    %c511_i32 = arith.constant 511 : i32
    %44 = tpu.dynamic_rotate %28 by %c511_i32 dim 1 : vector<8x512xf32>, i32 -> vector<8x512xf32>
    %45 = vector.extract_strided_slice %44 {offsets = [0, 128], sizes = [8, 256], strides = [1, 1]} : vector<8x512xf32> to vector<8x256xf32>
    %cst_18 = arith.constant 0.000000e+00 : f32
    %46 = vector.broadcast %cst_18 : f32 to vector<8x256xf32>
    %47 = arith.select %27, %45, %46 : vector<8x256xi1>, vector<8x256xf32>
    %c497_i32 = arith.constant 497 : i32
    %48 = tpu.dynamic_rotate %28 by %c497_i32 dim 1 : vector<8x512xf32>, i32 -> vector<8x512xf32>
    %49 = vector.extract_strided_slice %48 {offsets = [0, 128], sizes = [8, 256], strides = [1, 1]} : vector<8x512xf32> to vector<8x256xf32>
    %cst_19 = arith.constant 0.000000e+00 : f32
    %50 = vector.broadcast %cst_19 : f32 to vector<8x256xf32>
    %51 = arith.select %25, %49, %50 : vector<8x256xi1>, vector<8x256xf32>
    %c496_i32 = arith.constant 496 : i32
    %52 = tpu.dynamic_rotate %28 by %c496_i32 dim 1 : vector<8x512xf32>, i32 -> vector<8x512xf32>
    %53 = vector.extract_strided_slice %52 {offsets = [0, 128], sizes = [8, 256], strides = [1, 1]} : vector<8x512xf32> to vector<8x256xf32>
    %c495_i32 = arith.constant 495 : i32
    %54 = tpu.dynamic_rotate %28 by %c495_i32 dim 1 : vector<8x512xf32>, i32 -> vector<8x512xf32>
    %55 = vector.extract_strided_slice %54 {offsets = [0, 128], sizes = [8, 256], strides = [1, 1]} : vector<8x512xf32> to vector<8x256xf32>
    %cst_20 = arith.constant 0.000000e+00 : f32
    %56 = vector.broadcast %cst_20 : f32 to vector<8x256xf32>
    %57 = arith.select %27, %55, %56 : vector<8x256xi1>, vector<8x256xf32>
    %58 = tpu.concatenate %32, %34, %38, %42, %43, %47, %51, %53, %57 in 0 : vector<8x256xf32>, vector<8x256xf32>, vector<8x256xf32>, vector<8x256xf32>, vector<8x256xf32>, vector<8x256xf32>, vector<8x256xf32>, vector<8x256xf32>, vector<8x256xf32> -> vector<72x256xf32>
    %59 = arith.truncf %58 : vector<72x256xf32> to vector<72x256xbf16>
    %c0_21 = arith.constant 0 : index
    %c0_22 = arith.constant 0 : index
    %60 = vector.load %arg2[%c0_21, %c0_22] : memref<8x72xbf16, #tpu.memory_space<vmem>>, vector<8x72xbf16>
    %cst_23 = arith.constant dense<0.000000e+00> : vector<8x256xf32>
    %61 = tpu.matmul %60, %59, %cst_23 {dimension_numbers = #tpu.dot_dimension_numbers<[1], [0], [0], [1], [0, 0, 1, 1], [], []>} : vector<8x72xbf16>, vector<72x256xbf16>, vector<8x256xf32> -> vector<8x256xf32>
    %c0_24 = arith.constant 0 : index
    %c0_25 = arith.constant 0 : index
    %62 = vector.load %arg3[%c0_24, %c0_25] : memref<8x1xf32, #tpu.memory_space<vmem>>, vector<8x1xf32>
    %63 = vector.broadcast %62 : vector<8x1xf32> to vector<8x256xf32>
    %64 = arith.addf %61, %63 : vector<8x256xf32>
    %cst_26 = arith.constant 0.000000e+00 : f32
    %65 = vector.broadcast %cst_26 : f32 to vector<8x256xf32>
    %66 = arith.maximumf %64, %65 : vector<8x256xf32>
    %c0_27 = arith.constant 0 : index
    %c128_28 = arith.constant 128 : index
    %67 = vector.load %arg9[%c0_27, %c128_28] : memref<8x512xf32, #tpu.memory_space<vmem>>, vector<8x256xf32>
    tpu.vector_store %arg9[%c0_27, %c128_28], %66 {strides = array<i32>} : memref<8x512xf32, #tpu.memory_space<vmem>>, vector<8x256xf32>,
    %c0_29 = arith.constant 0 : index
    %c0_30 = arith.constant 0 : index
    %68 = vector.load %arg9[%c0_29, %c0_30] : memref<8x512xf32, #tpu.memory_space<vmem>>, vector<8x512xf32>
    %c17_i32_31 = arith.constant 17 : i32
    %69 = tpu.dynamic_rotate %68 by %c17_i32_31 dim 1 : vector<8x512xf32>, i32 -> vector<8x512xf32>
    %70 = vector.extract_strided_slice %69 {offsets = [0, 128], sizes = [8, 256], strides = [1, 1]} : vector<8x512xf32> to vector<8x256xf32>
    %cst_32 = arith.constant 0.000000e+00 : f32
    %71 = vector.broadcast %cst_32 : f32 to vector<8x256xf32>
    %72 = arith.select %25, %70, %71 : vector<8x256xi1>, vector<8x256xf32>
    %c16_i32_33 = arith.constant 16 : i32
    %73 = tpu.dynamic_rotate %68 by %c16_i32_33 dim 1 : vector<8x512xf32>, i32 -> vector<8x512xf32>
    %74 = vector.extract_strided_slice %73 {offsets = [0, 128], sizes = [8, 256], strides = [1, 1]} : vector<8x512xf32> to vector<8x256xf32>
    %c15_i32_34 = arith.constant 15 : i32
    %75 = tpu.dynamic_rotate %68 by %c15_i32_34 dim 1 : vector<8x512xf32>, i32 -> vector<8x512xf32>
    %76 = vector.extract_strided_slice %75 {offsets = [0, 128], sizes = [8, 256], strides = [1, 1]} : vector<8x512xf32> to vector<8x256xf32>
    %cst_35 = arith.constant 0.000000e+00 : f32
    %77 = vector.broadcast %cst_35 : f32 to vector<8x256xf32>
    %78 = arith.select %27, %76, %77 : vector<8x256xi1>, vector<8x256xf32>
    %c1_i32_36 = arith.constant 1 : i32
    %79 = tpu.dynamic_rotate %68 by %c1_i32_36 dim 1 : vector<8x512xf32>, i32 -> vector<8x512xf32>
    %80 = vector.extract_strided_slice %79 {offsets = [0, 128], sizes = [8, 256], strides = [1, 1]} : vector<8x512xf32> to vector<8x256xf32>
    %cst_37 = arith.constant 0.000000e+00 : f32
    %81 = vector.broadcast %cst_37 : f32 to vector<8x256xf32>
    %82 = arith.select %25, %80, %81 : vector<8x256xi1>, vector<8x256xf32>
    %83 = vector.extract_strided_slice %68 {offsets = [0, 128], sizes = [8, 256], strides = [1, 1]} : vector<8x512xf32> to vector<8x256xf32>
    %c511_i32_38 = arith.constant 511 : i32
    %84 = tpu.dynamic_rotate %68 by %c511_i32_38 dim 1 : vector<8x512xf32>, i32 -> vector<8x512xf32>
    %85 = vector.extract_strided_slice %84 {offsets = [0, 128], sizes = [8, 256], strides = [1, 1]} : vector<8x512xf32> to vector<8x256xf32>
    %cst_39 = arith.constant 0.000000e+00 : f32
    %86 = vector.broadcast %cst_39 : f32 to vector<8x256xf32>
    %87 = arith.select %27, %85, %86 : vector<8x256xi1>, vector<8x256xf32>
    %c497_i32_40 = arith.constant 497 : i32
    %88 = tpu.dynamic_rotate %68 by %c497_i32_40 dim 1 : vector<8x512xf32>, i32 -> vector<8x512xf32>
    %89 = vector.extract_strided_slice %88 {offsets = [0, 128], sizes = [8, 256], strides = [1, 1]} : vector<8x512xf32> to vector<8x256xf32>
    %cst_41 = arith.constant 0.000000e+00 : f32
    %90 = vector.broadcast %cst_41 : f32 to vector<8x256xf32>
    %91 = arith.select %25, %89, %90 : vector<8x256xi1>, vector<8x256xf32>
    %c496_i32_42 = arith.constant 496 : i32
    %92 = tpu.dynamic_rotate %68 by %c496_i32_42 dim 1 : vector<8x512xf32>, i32 -> vector<8x512xf32>
    %93 = vector.extract_strided_slice %92 {offsets = [0, 128], sizes = [8, 256], strides = [1, 1]} : vector<8x512xf32> to vector<8x256xf32>
    %c495_i32_43 = arith.constant 495 : i32
    %94 = tpu.dynamic_rotate %68 by %c495_i32_43 dim 1 : vector<8x512xf32>, i32 -> vector<8x512xf32>
    %95 = vector.extract_strided_slice %94 {offsets = [0, 128], sizes = [8, 256], strides = [1, 1]} : vector<8x512xf32> to vector<8x256xf32>
    %cst_44 = arith.constant 0.000000e+00 : f32
    %96 = vector.broadcast %cst_44 : f32 to vector<8x256xf32>
    %97 = arith.select %27, %95, %96 : vector<8x256xi1>, vector<8x256xf32>
    %98 = tpu.concatenate %72, %74, %78, %82, %83, %87, %91, %93, %97 in 0 : vector<8x256xf32>, vector<8x256xf32>, vector<8x256xf32>, vector<8x256xf32>, vector<8x256xf32>, vector<8x256xf32>, vector<8x256xf32>, vector<8x256xf32>, vector<8x256xf32> -> vector<72x256xf32>
    %99 = arith.truncf %98 : vector<72x256xf32> to vector<72x256xbf16>
    %c0_45 = arith.constant 0 : index
    %c0_46 = arith.constant 0 : index
    %100 = vector.load %arg4[%c0_45, %c0_46] : memref<8x72xbf16, #tpu.memory_space<vmem>>, vector<8x72xbf16>
    %cst_47 = arith.constant dense<0.000000e+00> : vector<8x256xf32>
    %101 = tpu.matmul %100, %99, %cst_47 {dimension_numbers = #tpu.dot_dimension_numbers<[1], [0], [0], [1], [0, 0, 1, 1], [], []>} : vector<8x72xbf16>, vector<72x256xbf16>, vector<8x256xf32> -> vector<8x256xf32>
    %c0_48 = arith.constant 0 : index
    %c0_49 = arith.constant 0 : index
    %102 = vector.load %arg5[%c0_48, %c0_49] : memref<8x1xf32, #tpu.memory_space<vmem>>, vector<8x1xf32>
    %103 = vector.broadcast %102 : vector<8x1xf32> to vector<8x256xf32>
    %104 = arith.addf %101, %103 : vector<8x256xf32>
    %cst_50 = arith.constant 0.000000e+00 : f32
    %105 = vector.broadcast %cst_50 : f32 to vector<8x256xf32>
    %106 = arith.maximumf %104, %105 : vector<8x256xf32>
    %c0_51 = arith.constant 0 : index
    %c128_52 = arith.constant 128 : index
    %107 = vector.load %arg9[%c0_51, %c128_52] : memref<8x512xf32, #tpu.memory_space<vmem>>, vector<8x256xf32>
    tpu.vector_store %arg9[%c0_51, %c128_52], %106 {strides = array<i32>} : memref<8x512xf32, #tpu.memory_space<vmem>>, vector<8x256xf32>,
    %c0_53 = arith.constant 0 : index
    %c0_54 = arith.constant 0 : index
    %108 = vector.load %arg9[%c0_53, %c0_54] : memref<8x512xf32, #tpu.memory_space<vmem>>, vector<8x512xf32>
    %c17_i32_55 = arith.constant 17 : i32
    %109 = tpu.dynamic_rotate %108 by %c17_i32_55 dim 1 : vector<8x512xf32>, i32 -> vector<8x512xf32>
    %110 = vector.extract_strided_slice %109 {offsets = [0, 128], sizes = [8, 256], strides = [1, 1]} : vector<8x512xf32> to vector<8x256xf32>
    %cst_56 = arith.constant 0.000000e+00 : f32
    %111 = vector.broadcast %cst_56 : f32 to vector<8x256xf32>
    %112 = arith.select %25, %110, %111 : vector<8x256xi1>, vector<8x256xf32>
    %c16_i32_57 = arith.constant 16 : i32
    %113 = tpu.dynamic_rotate %108 by %c16_i32_57 dim 1 : vector<8x512xf32>, i32 -> vector<8x512xf32>
    %114 = vector.extract_strided_slice %113 {offsets = [0, 128], sizes = [8, 256], strides = [1, 1]} : vector<8x512xf32> to vector<8x256xf32>
    %c15_i32_58 = arith.constant 15 : i32
    %115 = tpu.dynamic_rotate %108 by %c15_i32_58 dim 1 : vector<8x512xf32>, i32 -> vector<8x512xf32>
    %116 = vector.extract_strided_slice %115 {offsets = [0, 128], sizes = [8, 256], strides = [1, 1]} : vector<8x512xf32> to vector<8x256xf32>
    %cst_59 = arith.constant 0.000000e+00 : f32
    %117 = vector.broadcast %cst_59 : f32 to vector<8x256xf32>
    %118 = arith.select %27, %116, %117 : vector<8x256xi1>, vector<8x256xf32>
    %c1_i32_60 = arith.constant 1 : i32
    %119 = tpu.dynamic_rotate %108 by %c1_i32_60 dim 1 : vector<8x512xf32>, i32 -> vector<8x512xf32>
    %120 = vector.extract_strided_slice %119 {offsets = [0, 128], sizes = [8, 256], strides = [1, 1]} : vector<8x512xf32> to vector<8x256xf32>
    %cst_61 = arith.constant 0.000000e+00 : f32
    %121 = vector.broadcast %cst_61 : f32 to vector<8x256xf32>
    %122 = arith.select %25, %120, %121 : vector<8x256xi1>, vector<8x256xf32>
    %123 = vector.extract_strided_slice %108 {offsets = [0, 128], sizes = [8, 256], strides = [1, 1]} : vector<8x512xf32> to vector<8x256xf32>
    %c511_i32_62 = arith.constant 511 : i32
    %124 = tpu.dynamic_rotate %108 by %c511_i32_62 dim 1 : vector<8x512xf32>, i32 -> vector<8x512xf32>
    %125 = vector.extract_strided_slice %124 {offsets = [0, 128], sizes = [8, 256], strides = [1, 1]} : vector<8x512xf32> to vector<8x256xf32>
    %cst_63 = arith.constant 0.000000e+00 : f32
    %126 = vector.broadcast %cst_63 : f32 to vector<8x256xf32>
    %127 = arith.select %27, %125, %126 : vector<8x256xi1>, vector<8x256xf32>
    %c497_i32_64 = arith.constant 497 : i32
    %128 = tpu.dynamic_rotate %108 by %c497_i32_64 dim 1 : vector<8x512xf32>, i32 -> vector<8x512xf32>
    %129 = vector.extract_strided_slice %128 {offsets = [0, 128], sizes = [8, 256], strides = [1, 1]} : vector<8x512xf32> to vector<8x256xf32>
    %cst_65 = arith.constant 0.000000e+00 : f32
    %130 = vector.broadcast %cst_65 : f32 to vector<8x256xf32>
    %131 = arith.select %25, %129, %130 : vector<8x256xi1>, vector<8x256xf32>
    %c496_i32_66 = arith.constant 496 : i32
    %132 = tpu.dynamic_rotate %108 by %c496_i32_66 dim 1 : vector<8x512xf32>, i32 -> vector<8x512xf32>
    %133 = vector.extract_strided_slice %132 {offsets = [0, 128], sizes = [8, 256], strides = [1, 1]} : vector<8x512xf32> to vector<8x256xf32>
    %c495_i32_67 = arith.constant 495 : i32
    %134 = tpu.dynamic_rotate %108 by %c495_i32_67 dim 1 : vector<8x512xf32>, i32 -> vector<8x512xf32>
    %135 = vector.extract_strided_slice %134 {offsets = [0, 128], sizes = [8, 256], strides = [1, 1]} : vector<8x512xf32> to vector<8x256xf32>
    %cst_68 = arith.constant 0.000000e+00 : f32
    %136 = vector.broadcast %cst_68 : f32 to vector<8x256xf32>
    %137 = arith.select %27, %135, %136 : vector<8x256xi1>, vector<8x256xf32>
    %138 = tpu.concatenate %112, %114, %118, %122, %123, %127, %131, %133, %137 in 0 : vector<8x256xf32>, vector<8x256xf32>, vector<8x256xf32>, vector<8x256xf32>, vector<8x256xf32>, vector<8x256xf32>, vector<8x256xf32>, vector<8x256xf32>, vector<8x256xf32> -> vector<72x256xf32>
    %139 = arith.truncf %138 : vector<72x256xf32> to vector<72x256xbf16>
    %c0_69 = arith.constant 0 : index
    %c0_70 = arith.constant 0 : index
    %140 = vector.load %arg6[%c0_69, %c0_70] : memref<8x72xbf16, #tpu.memory_space<vmem>>, vector<8x72xbf16>
    %cst_71 = arith.constant dense<0.000000e+00> : vector<8x256xf32>
    %141 = tpu.matmul %140, %139, %cst_71 {dimension_numbers = #tpu.dot_dimension_numbers<[1], [0], [0], [1], [0, 0, 1, 1], [], []>} : vector<8x72xbf16>, vector<72x256xbf16>, vector<8x256xf32> -> vector<8x256xf32>
    %c0_72 = arith.constant 0 : index
    %c0_73 = arith.constant 0 : index
    %142 = vector.load %arg7[%c0_72, %c0_73] : memref<8x1xf32, #tpu.memory_space<vmem>>, vector<8x1xf32>
    %143 = vector.broadcast %142 : vector<8x1xf32> to vector<8x256xf32>
    %144 = arith.addf %141, %143 : vector<8x256xf32>
    %cst_74 = arith.constant 0.000000e+00 : f32
    %145 = vector.broadcast %cst_74 : f32 to vector<8x256xf32>
    %146 = arith.maximumf %144, %145 : vector<8x256xf32>
    %c0_75 = arith.constant 0 : index
    %c0_76 = arith.constant 0 : index
    %c0_77 = arith.constant 0 : index
    %147 = vector.load %arg8[%c0_75, %c0_76, %c0_77] : memref<1x8x256xf32, #tpu.memory_space<vmem>>, vector<1x8x256xf32>
    %148 = vector.shape_cast %147 : vector<1x8x256xf32> to vector<8x256xf32>
    %149 = vector.shape_cast %146 : vector<8x256xf32> to vector<1x8x256xf32>
    tpu.vector_store %arg8[%c0_75, %c0_76, %c0_77], %149 {strides = array<i32>} : memref<1x8x256xf32, #tpu.memory_space<vmem>>, vector<1x8x256xf32>,
    return
  }
  func.func @transform_0(%arg0: i32) -> (i32, i32, i32) {
    %c0_i32 = arith.constant 0 : i32
    %c0_i32_0 = arith.constant 0 : i32
    %c0_i32_1 = arith.constant 0 : i32
    return %arg0, %c0_i32, %c0_i32_0 : i32, i32, i32
  }
  func.func @transform_1(%arg0: i32) -> (i32, i32) {
    %c0_i32 = arith.constant 0 : i32
    %c0_i32_0 = arith.constant 0 : i32
    %c0_i32_1 = arith.constant 0 : i32
    return %c0_i32, %c0_i32_0 : i32, i32
  }
  func.func @transform_2(%arg0: i32) -> (i32, i32) {
    %c0_i32 = arith.constant 0 : i32
    %c0_i32_0 = arith.constant 0 : i32
    %c0_i32_1 = arith.constant 0 : i32
    return %c0_i32, %c0_i32_0 : i32, i32
  }
  func.func @transform_3(%arg0: i32) -> (i32, i32) {
    %c0_i32 = arith.constant 0 : i32
    %c0_i32_0 = arith.constant 0 : i32
    %c0_i32_1 = arith.constant 0 : i32
    return %c0_i32, %c0_i32_0 : i32, i32
  }
  func.func @transform_4(%arg0: i32) -> (i32, i32) {
    %c0_i32 = arith.constant 0 : i32
    %c0_i32_0 = arith.constant 0 : i32
    %c0_i32_1 = arith.constant 0 : i32
    return %c0_i32, %c0_i32_0 : i32, i32
  }
  func.func @transform_5(%arg0: i32) -> (i32, i32) {
    %c0_i32 = arith.constant 0 : i32
    %c0_i32_0 = arith.constant 0 : i32
    %c0_i32_1 = arith.constant 0 : i32
    return %c0_i32, %c0_i32_0 : i32, i32
  }
  func.func @transform_6(%arg0: i32) -> (i32, i32) {
    %c0_i32 = arith.constant 0 : i32
    %c0_i32_0 = arith.constant 0 : i32
    %c0_i32_1 = arith.constant 0 : i32
    return %c0_i32, %c0_i32_0 : i32, i32
  }
  func.func @transform_7(%arg0: i32) -> (i32, i32, i32) {
    %c0_i32 = arith.constant 0 : i32
    %c0_i32_0 = arith.constant 0 : i32
    %c0_i32_1 = arith.constant 0 : i32
    return %arg0, %c0_i32, %c0_i32_0 : i32, i32, i32
  }
}

</mosaic_0001>

<llo_original>
// kernel: _lambda_.1
$region0: #{_lambda_.1}
  #allocation0 [shape = 'u32[]', space=smem, size = 0x4, offset = 0x4, fixed_abs, tag = 'smem constant byte address 0x4 - core index']
  #allocation1 [shape = 'u32[144,128]{1,0:T(1,128)}', space=vmem, size = 0x12000, scoped, tag = 'internal scratch']
  #allocation2 [shape = 'f32[8,512]{1,0:T(8,128)}', space=vmem, size = 0x4000, scoped, tag = 'scratch operand']
  %s0 = inlined_call_operand.vmem [shape: f32[2,8,256], index: 0, kind: input, shape index: {}]
  %s1 = inlined_call_operand.vmem [shape: bf16[8,72], index: 1, kind: input, shape index: {}]
  %s2 = inlined_call_operand.vmem [shape: f32[8,1], index: 2, kind: input, shape index: {}]
  %s3 = inlined_call_operand.vmem [shape: bf16[8,72], index: 3, kind: input, shape index: {}]
  %s4 = inlined_call_operand.vmem [shape: f32[8,1], index: 4, kind: input, shape index: {}]
  %s5 = inlined_call_operand.vmem [shape: bf16[8,72], index: 5, kind: input, shape index: {}]
  %s6 = inlined_call_operand.vmem [shape: f32[8,1], index: 6, kind: input, shape index: {}]
  %s7 = inlined_call_operand.vmem [shape: f32[2,8,256], index: 7, kind: output, shape index: {}]
  %s8 = sld [smem:[#allocation0]]
  $region61: #{_lambda_.1} parent=0
    _
  %s10 = ssub.s32 1, %s8
  %s11 = scalar_select 0, %s10, %s8
  loop: start=0, step=1, limit=4
  $region2: #{_lambda_.1} parent=0 // loop_pre_header
    _
  $region3: #{_lambda_.1} parent=0 // loop_header
    %s13 = sphi 0, %s17
    %p14 = scmp.ge.s32.totalorder %s13, 4
    %s23 = sphi 0, %s25
    %s26 = sphi 0, %s23
    %s27 = sphi 0, %s26
    %s43 = sphi 0, %s27
    %s47 = sphi 0, %s47
    %s49 = sphi 0, %s47
    %s50 = sphi 0, %s49
    %s64 = sphi 0, %s50
    %s68 = sphi 0, %s68
    %s70 = sphi 0, %s68
    %s71 = sphi 0, %s70
    %s85 = sphi 0, %s71
    %s89 = sphi 0, %s89
    %s91 = sphi 0, %s89
    %s92 = sphi 0, %s91
    %s106 = sphi 0, %s92
    %s110 = sphi 0, %s110
    %s112 = sphi 0, %s110
    %s113 = sphi 0, %s112
    %s127 = sphi 0, %s113
    %s131 = sphi 0, %s131
    %s133 = sphi 0, %s131
    %s134 = sphi 0, %s133
    %s148 = sphi 0, %s134
    %s152 = sphi 0, %s152
    %s154 = sphi 0, %s152
    %s155 = sphi 0, %s154
    %s169 = sphi 0, %s155
    %s175 = sphi 0, %s177
    %s178 = sphi 0, %s175
    %s179 = sphi 0, %s178
    %s195 = sphi 0, %s179
  $region4: #{_lambda_.1} parent=0 // loop_header_branch
    %16 = sbr.rel (%p14) target = $region8
  $region5: #{_lambda_.1} parent=0 // loop_body
    %s18 = ssub.s32 %s13, 1
    %s19 = ssub.s32 %s13, 2
    %s20 = sadd.s32 %s13, 1
    %s21 = ssub.s32 %s13, %s20
    %p22 = scmp.eq.s32.totalorder %s21, 0
    %s24 = sadd.s32 %s23, 1
    %s25 = scalar_select %p22, %s23, %s24
    %p28 = pneg %p22
    %p29 = scmp.eq.s32.totalorder %s13, 1
    %p30 = por %p28, %p29
    %p31 = scmp.ne.s32.totalorder %s23, %s26
    %p32 = scmp.eq.s32.totalorder %s13, 0
    %p33 = por %p31, %p32
    %p34 = scmp.ne.s32.totalorder %s23, %s26
    %p35 = scmp.eq.s32.totalorder %s18, 1
    %p36 = por %p34, %p35
    %p37 = scmp.ne.s32.totalorder %s26, %s27
    %p38 = scmp.eq.s32.totalorder %s18, 0
    %p39 = por %p37, %p38
    %p40 = scmp.ne.s32.totalorder %s26, %s27
    %p41 = scmp.eq.s32.totalorder %s19, 1
    %p42 = por %p40, %p41
    %p44 = scmp.ne.s32.totalorder %s27, %s43
    %p45 = scmp.eq.s32.totalorder %s19, 0
    %p46 = por %p44, %p45
    %s48 = sadd.s32 %s47, 1
    %p51 = scmp.eq.s32.totalorder %s13, 1
    %p52 = scmp.ne.s32.totalorder %s47, %s49
    %p53 = scmp.eq.s32.totalorder %s13, 0
    %p54 = por %p52, %p53
    %p55 = scmp.ne.s32.totalorder %s47, %s49
    %p56 = scmp.eq.s32.totalorder %s18, 1
    %p57 = por %p55, %p56
    %p58 = scmp.ne.s32.totalorder %s49, %s50
    %p59 = scmp.eq.s32.totalorder %s18, 0
    %p60 = por %p58, %p59
    %p61 = scmp.ne.s32.totalorder %s49, %s50
    %p62 = scmp.eq.s32.totalorder %s19, 1
    %p63 = por %p61, %p62
    %p65 = scmp.ne.s32.totalorder %s50, %s64
    %p66 = scmp.eq.s32.totalorder %s19, 0
    %p67 = por %p65, %p66
    %s69 = sadd.s32 %s68, 1
    %p72 = scmp.eq.s32.totalorder %s13, 1
    %p73 = scmp.ne.s32.totalorder %s68, %s70
    %p74 = scmp.eq.s32.totalorder %s13, 0
    %p75 = por %p73, %p74
    %p76 = scmp.ne.s32.totalorder %s68, %s70
    %p77 = scmp.eq.s32.totalorder %s18, 1
    %p78 = por %p76, %p77
    %p79 = scmp.ne.s32.totalorder %s70, %s71
    %p80 = scmp.eq.s32.totalorder %s18, 0
    %p81 = por %p79, %p80
    %p82 = scmp.ne.s32.totalorder %s70, %s71
    %p83 = scmp.eq.s32.totalorder %s19, 1
    %p84 = por %p82, %p83
    %p86 = scmp.ne.s32.totalorder %s71, %s85
    %p87 = scmp.eq.s32.totalorder %s19, 0
    %p88 = por %p86, %p87
    %s90 = sadd.s32 %s89, 1
    %p93 = scmp.eq.s32.totalorder %s13, 1
    %p94 = scmp.ne.s32.totalorder %s89, %s91
    %p95 = scmp.eq.s32.totalorder %s13, 0
    %p96 = por %p94, %p95
    %p97 = scmp.ne.s32.totalorder %s89, %s91
    %p98 = scmp.eq.s32.totalorder %s18, 1
    %p99 = por %p97, %p98
    %p100 = scmp.ne.s32.totalorder %s91, %s92
    %p101 = scmp.eq.s32.totalorder %s18, 0
    %p102 = por %p100, %p101
    %p103 = scmp.ne.s32.totalorder %s91, %s92
    %p104 = scmp.eq.s32.totalorder %s19, 1
    %p105 = por %p103, %p104
    %p107 = scmp.ne.s32.totalorder %s92, %s106
    %p108 = scmp.eq.s32.totalorder %s19, 0
    %p109 = por %p107, %p108
    %s111 = sadd.s32 %s110, 1
    %p114 = scmp.eq.s32.totalorder %s13, 1
    %p115 = scmp.ne.s32.totalorder %s110, %s112
    %p116 = scmp.eq.s32.totalorder %s13, 0
    %p117 = por %p115, %p116
    %p118 = scmp.ne.s32.totalorder %s110, %s112
    %p119 = scmp.eq.s32.totalorder %s18, 1
    %p120 = por %p118, %p119
    %p121 = scmp.ne.s32.totalorder %s112, %s113
    %p122 = scmp.eq.s32.totalorder %s18, 0
    %p123 = por %p121, %p122
    %p124 = scmp.ne.s32.totalorder %s112, %s113
    %p125 = scmp.eq.s32.totalorder %s19, 1
    %p126 = por %p124, %p125
    %p128 = scmp.ne.s32.totalorder %s113, %s127
    %p129 = scmp.eq.s32.totalorder %s19, 0
    %p130 = por %p128, %p129
    %s132 = sadd.s32 %s131, 1
    %p135 = scmp.eq.s32.totalorder %s13, 1
    %p136 = scmp.ne.s32.totalorder %s131, %s133
    %p137 = scmp.eq.s32.totalorder %s13, 0
    %p138 = por %p136, %p137
    %p139 = scmp.ne.s32.totalorder %s131, %s133
    %p140 = scmp.eq.s32.totalorder %s18, 1
    %p141 = por %p139, %p140
    %p142 = scmp.ne.s32.totalorder %s133, %s134
    %p143 = scmp.eq.s32.totalorder %s18, 0
    %p144 = por %p142, %p143
    %p145 = scmp.ne.s32.totalorder %s133, %s134
    %p146 = scmp.eq.s32.totalorder %s19, 1
    %p147 = por %p145, %p146
    %p149 = scmp.ne.s32.totalorder %s134, %s148
    %p150 = scmp.eq.s32.totalorder %s19, 0
    %p151 = por %p149, %p150
    %s153 = sadd.s32 %s152, 1
    %p156 = scmp.eq.s32.totalorder %s13, 1
    %p157 = scmp.ne.s32.totalorder %s152, %s154
    %p158 = scmp.eq.s32.totalorder %s13, 0
    %p159 = por %p157, %p158
    %p160 = scmp.ne.s32.totalorder %s152, %s154
    %p161 = scmp.eq.s32.totalorder %s18, 1
    %p162 = por %p160, %p161
    %p163 = scmp.ne.s32.totalorder %s154, %s155
    %p164 = scmp.eq.s32.totalorder %s18, 0
    %p165 = por %p163, %p164
    %p166 = scmp.ne.s32.totalorder %s154, %s155
    %p167 = scmp.eq.s32.totalorder %s19, 1
    %p168 = por %p166, %p167
    %p170 = scmp.ne.s32.totalorder %s155, %s169
    %p171 = scmp.eq.s32.totalorder %s19, 0
    %p172 = por %p170, %p171
    %s173 = ssub.s32 %s13, %s20
    %p174 = scmp.eq.s32.totalorder %s173, 0
    %s176 = sadd.s32 %s175, 1
    %s177 = scalar_select %p174, %s175, %s176
    %p180 = pneg %p174
    %p181 = scmp.eq.s32.totalorder %s13, 1
    %p182 = por %p180, %p181
    %p183 = scmp.ne.s32.totalorder %s175, %s178
    %p184 = scmp.eq.s32.totalorder %s13, 0
    %p185 = por %p183, %p184
    %p186 = scmp.ne.s32.totalorder %s175, %s178
    %p187 = scmp.eq.s32.totalorder %s18, 1
    %p188 = por %p186, %p187
    %p189 = scmp.ne.s32.totalorder %s178, %s179
    %p190 = scmp.eq.s32.totalorder %s18, 0
    %p191 = por %p189, %p190
    %p192 = scmp.ne.s32.totalorder %s178, %s179
    %p193 = scmp.eq.s32.totalorder %s19, 1
    %p194 = por %p192, %p193
    %p196 = scmp.ne.s32.totalorder %s179, %s195
    %p197 = scmp.eq.s32.totalorder %s19, 0
    %p198 = por %p196, %p197
    %p199 = scmp.le.s32.totalorder 1, %s13
    %p200 = scmp.lt.s32.totalorder %s13, 3
    %p201 = pnand %p199, %p200
    %p202 = pneg %p201
    // Predicated region
    $region9: #{_lambda_.1} parent=5 // pred_check
      _
    $region10: #{_lambda_.1} parent=5 // pred_check_branch
      %204 = sbr.rel (%p201) target = $region12
    $region11: #{_lambda_.1} parent=5 // pred_region
      %s205 = ssub.s32 %s13, 1
      // Predicated region
      $region13: #{_lambda_.1} parent=11 // pred_check
        %p206 = pneg %p60
      $region14: #{_lambda_.1} parent=11 // pred_check_branch
        %208 = sbr.rel (%p206) target = $region16
      $region15: #{_lambda_.1} parent=11 // pred_region
        _
      $region16: #{_lambda_.1} parent=11 // pred_fallthru
        _
      // Predicated region
      $region17: #{_lambda_.1} parent=11 // pred_check
        %p209 = pneg %p81
      $region18: #{_lambda_.1} parent=11 // pred_check_branch
        %211 = sbr.rel (%p209) target = $region20
      $region19: #{_lambda_.1} parent=11 // pred_region
        _
      $region20: #{_lambda_.1} parent=11 // pred_fallthru
        _
      // Predicated region
      $region21: #{_lambda_.1} parent=11 // pred_check
        %p212 = pneg %p102
      $region22: #{_lambda_.1} parent=11 // pred_check_branch
        %214 = sbr.rel (%p212) target = $region24
      $region23: #{_lambda_.1} parent=11 // pred_region
        _
      $region24: #{_lambda_.1} parent=11 // pred_fallthru
        _
      // Predicated region
      $region25: #{_lambda_.1} parent=11 // pred_check
        %p215 = pneg %p123
      $region26: #{_lambda_.1} parent=11 // pred_check_branch
        %217 = sbr.rel (%p215) target = $region28
      $region27: #{_lambda_.1} parent=11 // pred_region
        _
      $region28: #{_lambda_.1} parent=11 // pred_fallthru
        _
      // Predicated region
      $region29: #{_lambda_.1} parent=11 // pred_check
        %p218 = pneg %p144
      $region30: #{_lambda_.1} parent=11 // pred_check_branch
        %220 = sbr.rel (%p218) target = $region32
      $region31: #{_lambda_.1} parent=11 // pred_region
        _
      $region32: #{_lambda_.1} parent=11 // pred_fallthru
        _
      // Predicated region
      $region33: #{_lambda_.1} parent=11 // pred_check
        %p221 = pneg %p165
      $region34: #{_lambda_.1} parent=11 // pred_check_branch
        %223 = sbr.rel (%p221) target = $region36
      $region35: #{_lambda_.1} parent=11 // pred_region
        _
      $region36: #{_lambda_.1} parent=11 // pred_fallthru
        _
    $region12: #{_lambda_.1} parent=5 // pred_fallthru
      _
    %p224 = scmp.lt.s32.totalorder %s13, 2
    // Predicated region
    $region37: #{_lambda_.1} parent=5 // pred_check
      %p225 = pneg %p224
    $region38: #{_lambda_.1} parent=5 // pred_check_branch
      %227 = sbr.rel (%p225) target = $region40
    $region39: #{_lambda_.1} parent=5 // pred_region
      // Predicated region
      $region41: #{_lambda_.1} parent=39 // pred_check
        %p228 = pneg %p33
      $region42: #{_lambda_.1} parent=39 // pred_check_branch
        %230 = sbr.rel (%p228) target = $region44
      $region43: #{_lambda_.1} parent=39 // pred_region
        %p231 = scmp.lt.s32.totalorder %s13, 1
        %s232 = scalar_select %p231, %s13, 1
        %s233 = smul.addr %s232, 2
        %s234 = smul.addr %s233, 8
        %s235 = scalar_lea.vmem %s0, %s234
      $region44: #{_lambda_.1} parent=39 // pred_fallthru
        _
    $region40: #{_lambda_.1} parent=5 // pred_fallthru
      _
    %p236 = scmp.le.s32.totalorder 1, %s13
    %p237 = scmp.lt.s32.totalorder %s13, 3
    %p238 = pnand %p236, %p237
    %p239 = pneg %p238
    // Predicated region
    $region45: #{_lambda_.1} parent=5 // pred_check
      _
    $region46: #{_lambda_.1} parent=5 // pred_check_branch
      %241 = sbr.rel (%p238) target = $region48
    $region47: #{_lambda_.1} parent=5 // pred_region
      %s242 = ssub.s32 %s13, 1
      %p243 = scmp.lt.s32.totalorder %s18, 1
      %s244 = scalar_select %p243, %s18, 1
      %s245 = smul.addr %s244, 2
      %s246 = smul.addr %s245, 8
      %s247 = scalar_lea.vmem %s0, %s246
      %p248 = pneg %p39
      %p249 = pneg %p36
      %p250 = pneg %p60
      %p251 = pneg %p57
      %p252 = pneg %p81
      %p253 = pneg %p78
      %p254 = pneg %p102
      %p255 = pneg %p99
      %p256 = pneg %p123
      %p257 = pneg %p120
      %p258 = pneg %p144
      %p259 = pneg %p141
      %p260 = pneg %p165
      %p261 = pneg %p162
      %p262 = pneg %p191
      %p263 = pneg %p188
      %p264 = scmp.lt.s32.totalorder %s18, 1
      %s265 = scalar_select %p264, %s18, 1
      %s266 = smul.addr %s265, 2
      %s267 = smul.addr %s266, 8
      %s268 = scalar_lea.vmem %s7, %s267
      %p269 = scmp.lt.s32.totalorder %s18, 1
      %s270 = scalar_select %p269, %s18, 1
      %s271 = smul.addr %s270, 2
      %s272 = smul.addr %s271, 8
      %s273 = scalar_lea.vmem %s0, %s272
      %p274 = scmp.lt.s32.totalorder %s18, 1
      %s275 = scalar_select %p274, %s18, 1
      %s276 = smul.addr %s275, 2
      %s277 = smul.addr %s276, 8
      %s278 = scalar_lea.vmem %s7, %s277
      %280 = vst [vmem:[#allocation2] sm:$0xff] 0.0
      %281 = vst [vmem:[#allocation2 + $0x18] sm:$0xff] 0.0
      %v282 = vld [vmem:[%s273] sm:$0xff]
      %v283 = vld [vmem:[%s273 + $0x8] sm:$0xff]
      %284 = vst [vmem:[#allocation2 + $0x8] sm:$0xff] %v282
      %285 = vst [vmem:[#allocation2 + $0x10] sm:$0xff] %v283
      %v286 = vlaneseq
      %v287 = vand.u32 %v286, 127
      %v288 = vadd.s32 %v287, 128
      %vm289 = vcmp.lt.s32.totalorder %v287, 0
      %v290 = vsub.s32 0, %v287
      %v291 = vsel %vm289, %v290, %v287
      %v292 = vshrl.u32 %v291, 4
      %v293 = vand.u32 %v291, 15
      %v294 = vsub.s32 0, %v293
      %v295 = vsel %vm289, %v294, %v293
      %vm296 = vcmp.lt.s32.totalorder %v288, 0
      %v297 = vsub.s32 0, %v288
      %v298 = vsel %vm296, %v297, %v288
      %v299 = vshrl.u32 %v298, 4
      %v300 = vand.u32 %v298, 15
      %v301 = vsub.s32 0, %v300
      %v302 = vsel %vm296, %v301, %v300
      %vm303 = vcmp.ne.s32.totalorder %v295, 0
      %vm304 = vcmp.ne.s32.totalorder %v302, 0
      %vm305 = vcmp.lt.s32.totalorder %v295, 0
      %vm306 = vcmp.lt.s32.totalorder %v302, 0
      %vm307 = vmand %vm305, %vm303
      %vm308 = vmand %vm306, %vm304
      %v309 = vadd.s32 %v295, 16
      %v310 = vadd.s32 %v302, 16
      %v311 = vsel %vm307, %v309, %v295
      %v312 = vsel %vm308, %v310, %v302
      %vm313 = vcmp.ge.s32.totalorder %v311, 1
      %vm314 = vcmp.ge.s32.totalorder %v312, 1
      %vm315 = vcmp.le.s32.totalorder %v311, 14
      %vm316 = vcmp.le.s32.totalorder %v312, 14
      %v317 = vld [vmem:[#allocation2] sm:$0xff]
      %v318 = vld [vmem:[#allocation2 + $0x8] sm:$0xff]
      %v319 = vld [vmem:[#allocation2 + $0x10] sm:$0xff]
      %v320 = vld [vmem:[#allocation2 + $0x18] sm:$0xff]
      %321 = vrot.lane.b32.xlu0 %v317, 17
      %v322 = vpop.permute.xlu0 %321
      %323 = vrot.lane.b32.xlu0 %v318, 17
      %v324 = vpop.permute.xlu0 %323
      %325 = vrot.lane.b32.xlu0 %v319, 17
      %v326 = vpop.permute.xlu0 %325
      %vm327 = vcmp.lt.s32.totalorder %v287, 17
      %v328 = vsel %vm327, %v324, %v326
      %v329 = vsel %vm327, %v322, %v324
      %v330 = vsel %vm313, %v329, 0.0
      %v331 = vsel %vm314, %v328, 0.0
      %332 = vrot.lane.b32.xlu0 %v317, 16
      %v333 = vpop.permute.xlu0 %332
      %334 = vrot.lane.b32.xlu0 %v318, 16
      %v335 = vpop.permute.xlu0 %334
      %336 = vrot.lane.b32.xlu0 %v319, 16
      %v337 = vpop.permute.xlu0 %336
      %vm338 = vcmp.lt.s32.totalorder %v287, 16
      %v339 = vsel %vm338, %v335, %v337
      %v340 = vsel %vm338, %v333, %v335
      %341 = vrot.lane.b32.xlu0 %v317, 15
      %v342 = vpop.permute.xlu0 %341
      %343 = vrot.lane.b32.xlu0 %v318, 15
      %v344 = vpop.permute.xlu0 %343
      %345 = vrot.lane.b32.xlu0 %v319, 15
      %v346 = vpop.permute.xlu0 %345
      %vm347 = vcmp.lt.s32.totalorder %v287, 15
      %v348 = vsel %vm347, %v344, %v346
      %v349 = vsel %vm347, %v342, %v344
      %v350 = vsel %vm315, %v349, 0.0
      %v351 = vsel %vm316, %v348, 0.0
      %352 = vrot.lane.b32.xlu0 %v317, 1
      %v353 = vpop.permute.xlu0 %352
      %354 = vrot.lane.b32.xlu0 %v318, 1
      %v355 = vpop.permute.xlu0 %354
      %356 = vrot.lane.b32.xlu0 %v319, 1
      %v357 = vpop.permute.xlu0 %356
      %vm358 = vcmp.lt.s32.totalorder %v287, 1
      %v359 = vsel %vm358, %v355, %v357
      %v360 = vsel %vm358, %v353, %v355
      %v361 = vsel %vm313, %v360, 0.0
      %v362 = vsel %vm314, %v359, 0.0
      %363 = vrot.lane.b32.xlu0 %v318, 127
      %v364 = vpop.permute.xlu0 %363
      %365 = vrot.lane.b32.xlu0 %v319, 127
      %v366 = vpop.permute.xlu0 %365
      %367 = vrot.lane.b32.xlu0 %v320, 127
      %v368 = vpop.permute.xlu0 %367
      %vm369 = vcmp.lt.s32.totalorder %v287, 127
      %v370 = vsel %vm369, %v366, %v368
      %v371 = vsel %vm369, %v364, %v366
      %v372 = vsel %vm315, %v371, 0.0
      %v373 = vsel %vm316, %v370, 0.0
      %374 = vrot.lane.b32.xlu0 %v318, 113
      %v375 = vpop.permute.xlu0 %374
      %376 = vrot.lane.b32.xlu0 %v319, 113
      %v377 = vpop.permute.xlu0 %376
      %378 = vrot.lane.b32.xlu0 %v320, 113
      %v379 = vpop.permute.xlu0 %378
      %vm380 = vcmp.lt.s32.totalorder %v287, 113
      %v381 = vsel %vm380, %v377, %v379
      %v382 = vsel %vm380, %v375, %v377
      %v383 = vsel %vm313, %v382, 0.0
      %v384 = vsel %vm314, %v381, 0.0
      %385 = vrot.lane.b32.xlu0 %v318, 112
      %v386 = vpop.permute.xlu0 %385
      %387 = vrot.lane.b32.xlu0 %v319, 112
      %v388 = vpop.permute.xlu0 %387
      %389 = vrot.lane.b32.xlu0 %v320, 112
      %v390 = vpop.permute.xlu0 %389
      %vm391 = vcmp.lt.s32.totalorder %v287, 112
      %v392 = vsel %vm391, %v388, %v390
      %v393 = vsel %vm391, %v386, %v388
      %394 = vrot.lane.b32.xlu0 %v318, 111
      %v395 = vpop.permute.xlu0 %394
      %396 = vrot.lane.b32.xlu0 %v319, 111
      %v397 = vpop.permute.xlu0 %396
      %398 = vrot.lane.b32.xlu0 %v320, 111
      %v399 = vpop.permute.xlu0 %398
      %vm400 = vcmp.lt.s32.totalorder %v287, 111
      %v401 = vsel %vm400, %v397, %v399
      %v402 = vsel %vm400, %v395, %v397
      %v403 = vsel %vm315, %v402, 0.0
      %v404 = vsel %vm316, %v401, 0.0
      %v405 = vpack.c.bf16 %v340, %v330
      %v406 = vpack.c.bf16 %v339, %v331
      %v407 = vpack.c.bf16 %v361, %v350
      %v408 = vpack.c.bf16 %v362, %v351
      %v409 = vpack.c.bf16 %v372, %v318
      %v410 = vpack.c.bf16 %v373, %v319
      %v411 = vpack.c.bf16 %v393, %v383
      %v412 = vpack.c.bf16 %v392, %v384
      %v413 = vpack.c.bf16 %v403, %v403
      %v414 = vpack.c.bf16 %v404, %v404
      %v415 = vld [vmem:[%s1] sm:$0xf]
      %v416 = vld [vmem:[%s2] sm:$0xff]
      %418 = vset.pattern.permute.xlu0 0
      %419 = vperm.xlu0 %418, %v416
      %v420 = vpop.permute.xlu0 %419
      %vm422 = vcmask 588800
      %v424 = vsel %vm422, %v415, 0
      %vm426 = vcmask 1043456
      %v428 = vsel %vm426, %v413, 0
      %v431 = vsel %vm426, %v414, 0
      %433 = vmatprep.subr.bf16.mxu0 %v406
      %434 = vmatpush1.bf16.msra.mxu0 %v405
      %435 = vmatprep.subr.bf16.mxu0 %v408
      %436 = vmatpush1.bf16.msra.mxu0 %v407
      %437 = vmatprep.subr.bf16.mxu0 %v410
      %438 = vmatpush1.bf16.msra.mxu0 %v409
      %439 = vmatprep.subr.bf16.mxu0 %v412
      %440 = vmatpush1.bf16.msra.mxu0 %v411
      %441 = vmatprep.subr.bf16.mxu0 %v431
      %442 = vmatpush1.bf16.msra.mxu0 %v428
      %443 = vmatprep.subr.bf16.mxu0 0
      %444 = vmatpush1.bf16.msra.mxu0 0
      %445 = vmatprep.subr.bf16.mxu0 0
      %446 = vmatpush1.bf16.msra.mxu0 0
      %447 = vmatprep.subr.bf16.mxu0 0
      %448 = vmatpush1.bf16.msra.mxu0 0
      %449 = vmatprep.subr.bf16.mxu0 0
      %450 = vmatpush1.bf16.msra.mxu0 0
      %451 = vmatprep.subr.bf16.mxu0 0
      %452 = vmatpush1.bf16.msra.mxu0 0
      %453 = vmatprep.subr.bf16.mxu0 0
      %454 = vmatpush1.bf16.msra.mxu0 0
      %455 = vmatprep.subr.bf16.mxu0 0
      %456 = vmatpush1.bf16.msra.mxu0 0
      %457 = vmatprep.subr.bf16.mxu0 0
      %458 = vmatpush1.bf16.msra.mxu0 0
      %459 = vmatprep.subr.bf16.mxu0 0
      %460 = vmatpush1.bf16.msra.mxu0 0
      %461 = vmatprep.subr.bf16.mxu0 0
      %462 = vmatpush1.bf16.msra.mxu0 0
      %463 = vmatprep.subr.bf16.mxu0 0
      %464 = vmatpush1.bf16.msra.mxu0 0
      %465 = vmatprep.mubr.bf16.mxu0 0
      %466 = vmatmul.mubr.bf16.gmra.mrb[0].mxu0 %v424
      %v467 = vpop.f32.mrb[0].mxu0
      %v468 = vadd.f32 %v420, %v467
      %v469 = vpop.f32.mrb[0].mxu0
      %v470 = vadd.f32 %v420, %v469
      %v471 = vpop.f32.mrb[0].mxu0
      %v472 = vpop.f32.mrb[0].mxu0
      %473 = vdwg.mxu0
      %v474 = vmax.f32 %v468, 0.0
      %v475 = vmax.f32 %v470, 0.0
      %476 = vst [vmem:[#allocation2 + $0x8] sm:$0xff] %v474
      %477 = vst [vmem:[#allocation2 + $0x10] sm:$0xff] %v475
      %v478 = vld [vmem:[#allocation2] sm:$0xff]
      %v479 = vld [vmem:[#allocation2 + $0x8] sm:$0xff]
      %v480 = vld [vmem:[#allocation2 + $0x10] sm:$0xff]
      %v481 = vld [vmem:[#allocation2 + $0x18] sm:$0xff]
      %482 = vrot.lane.b32.xlu0 %v478, 17
      %v483 = vpop.permute.xlu0 %482
      %484 = vrot.lane.b32.xlu0 %v479, 17
      %v485 = vpop.permute.xlu0 %484
      %486 = vrot.lane.b32.xlu0 %v480, 17
      %v487 = vpop.permute.xlu0 %486
      %v488 = vsel %vm327, %v485, %v487
      %v489 = vsel %vm327, %v483, %v485
      %v490 = vsel %vm313, %v489, 0.0
      %v491 = vsel %vm314, %v488, 0.0
      %492 = vrot.lane.b32.xlu0 %v478, 16
      %v493 = vpop.permute.xlu0 %492
      %494 = vrot.lane.b32.xlu0 %v479, 16
      %v495 = vpop.permute.xlu0 %494
      %496 = vrot.lane.b32.xlu0 %v480, 16
      %v497 = vpop.permute.xlu0 %496
      %v498 = vsel %vm338, %v495, %v497
      %v499 = vsel %vm338, %v493, %v495
      %500 = vrot.lane.b32.xlu0 %v478, 15
      %v501 = vpop.permute.xlu0 %500
      %502 = vrot.lane.b32.xlu0 %v479, 15
      %v503 = vpop.permute.xlu0 %502
      %504 = vrot.lane.b32.xlu0 %v480, 15
      %v505 = vpop.permute.xlu0 %504
      %v506 = vsel %vm347, %v503, %v505
      %v507 = vsel %vm347, %v501, %v503
      %v508 = vsel %vm315, %v507, 0.0
      %v509 = vsel %vm316, %v506, 0.0
      %510 = vrot.lane.b32.xlu0 %v478, 1
      %v511 = vpop.permute.xlu0 %510
      %512 = vrot.lane.b32.xlu0 %v479, 1
      %v513 = vpop.permute.xlu0 %512
      %514 = vrot.lane.b32.xlu0 %v480, 1
      %v515 = vpop.permute.xlu0 %514
      %v516 = vsel %vm358, %v513, %v515
      %v517 = vsel %vm358, %v511, %v513
      %v518 = vsel %vm313, %v517, 0.0
      %v519 = vsel %vm314, %v516, 0.0
      %520 = vrot.lane.b32.xlu0 %v479, 127
      %v521 = vpop.permute.xlu0 %520
      %522 = vrot.lane.b32.xlu0 %v480, 127
      %v523 = vpop.permute.xlu0 %522
      %524 = vrot.lane.b32.xlu0 %v481, 127
      %v525 = vpop.permute.xlu0 %524
      %v526 = vsel %vm369, %v523, %v525
      %v527 = vsel %vm369, %v521, %v523
      %v528 = vsel %vm315, %v527, 0.0
      %v529 = vsel %vm316, %v526, 0.0
      %530 = vrot.lane.b32.xlu0 %v479, 113
      %v531 = vpop.permute.xlu0 %530
      %532 = vrot.lane.b32.xlu0 %v480, 113
      %v533 = vpop.permute.xlu0 %532
      %534 = vrot.lane.b32.xlu0 %v481, 113
      %v535 = vpop.permute.xlu0 %534
      %v536 = vsel %vm380, %v533, %v535
      %v537 = vsel %vm380, %v531, %v533
      %v538 = vsel %vm313, %v537, 0.0
      %v539 = vsel %vm314, %v536, 0.0
      %540 = vrot.lane.b32.xlu0 %v479, 112
      %v541 = vpop.permute.xlu0 %540
      %542 = vrot.lane.b32.xlu0 %v480, 112
      %v543 = vpop.permute.xlu0 %542
      %544 = vrot.lane.b32.xlu0 %v481, 112
      %v545 = vpop.permute.xlu0 %544
      %v546 = vsel %vm391, %v543, %v545
      %v547 = vsel %vm391, %v541, %v543
      %548 = vrot.lane.b32.xlu0 %v479, 111
      %v549 = vpop.permute.xlu0 %548
      %550 = vrot.lane.b32.xlu0 %v480, 111
      %v551 = vpop.permute.xlu0 %550
      %552 = vrot.lane.b32.xlu0 %v481, 111
      %v553 = vpop.permute.xlu0 %552
      %v554 = vsel %vm400, %v551, %v553
      %v555 = vsel %vm400, %v549, %v551
      %v556 = vsel %vm315, %v555, 0.0
      %v557 = vsel %vm316, %v554, 0.0
      %v558 = vpack.c.bf16 %v499, %v490
      %v559 = vpack.c.bf16 %v498, %v491
      %v560 = vpack.c.bf16 %v518, %v508
      %v561 = vpack.c.bf16 %v519, %v509
      %v562 = vpack.c.bf16 %v528, %v479
      %v563 = vpack.c.bf16 %v529, %v480
      %v564 = vpack.c.bf16 %v547, %v538
      %v565 = vpack.c.bf16 %v546, %v539
      %v566 = vpack.c.bf16 %v556, %v556
      %v567 = vpack.c.bf16 %v557, %v557
      %v568 = vld [vmem:[%s3] sm:$0xf]
      %v569 = vld [vmem:[%s4] sm:$0xff]
      %571 = vset.pattern.permute.xlu0 0
      %572 = vperm.xlu0 %571, %v569
      %v573 = vpop.permute.xlu0 %572
      %v576 = vsel %vm422, %v568, 0
      %v579 = vsel %vm426, %v566, 0
      %v582 = vsel %vm426, %v567, 0
      %584 = vmatprep.subr.bf16.mxu0 %v559
      %585 = vmatpush1.bf16.msra.mxu0 %v558
      %586 = vmatprep.subr.bf16.mxu0 %v561
      %587 = vmatpush1.bf16.msra.mxu0 %v560
      %588 = vmatprep.subr.bf16.mxu0 %v563
      %589 = vmatpush1.bf16.msra.mxu0 %v562
      %590 = vmatprep.subr.bf16.mxu0 %v565
      %591 = vmatpush1.bf16.msra.mxu0 %v564
      %592 = vmatprep.subr.bf16.mxu0 %v582
      %593 = vmatpush1.bf16.msra.mxu0 %v579
      %594 = vmatprep.subr.bf16.mxu0 0
      %595 = vmatpush1.bf16.msra.mxu0 0
      %596 = vmatprep.subr.bf16.mxu0 0
      %597 = vmatpush1.bf16.msra.mxu0 0
      %598 = vmatprep.subr.bf16.mxu0 0
      %599 = vmatpush1.bf16.msra.mxu0 0
      %600 = vmatprep.subr.bf16.mxu0 0
      %601 = vmatpush1.bf16.msra.mxu0 0
      %602 = vmatprep.subr.bf16.mxu0 0
      %603 = vmatpush1.bf16.msra.mxu0 0
      %604 = vmatprep.subr.bf16.mxu0 0
      %605 = vmatpush1.bf16.msra.mxu0 0
      %606 = vmatprep.subr.bf16.mxu0 0
      %607 = vmatpush1.bf16.msra.mxu0 0
      %608 = vmatprep.subr.bf16.mxu0 0
      %609 = vmatpush1.bf16.msra.mxu0 0
      %610 = vmatprep.subr.bf16.mxu0 0
      %611 = vmatpush1.bf16.msra.mxu0 0
      %612 = vmatprep.subr.bf16.mxu0 0
      %613 = vmatpush1.bf16.msra.mxu0 0
      %614 = vmatprep.subr.bf16.mxu0 0
      %615 = vmatpush1.bf16.msra.mxu0 0
      %616 = vmatprep.mubr.bf16.mxu0 0
      %617 = vmatmul.mubr.bf16.gmra.mrb[0].mxu0 %v576
      %v618 = vpop.f32.mrb[0].mxu0
      %v619 = vadd.f32 %v573, %v618
      %v620 = vpop.f32.mrb[0].mxu0
      %v621 = vadd.f32 %v573, %v620
      %v622 = vpop.f32.mrb[0].mxu0
      %v623 = vpop.f32.mrb[0].mxu0
      %624 = vdwg.mxu0
      %v625 = vmax.f32 %v619, 0.0
      %v626 = vmax.f32 %v621, 0.0
      %627 = vst [vmem:[#allocation2 + $0x8] sm:$0xff] %v625
      %628 = vst [vmem:[#allocation2 + $0x10] sm:$0xff] %v626
      %v629 = vld [vmem:[#allocation2] sm:$0xff]
      %v630 = vld [vmem:[#allocation2 + $0x8] sm:$0xff]
      %v631 = vld [vmem:[#allocation2 + $0x10] sm:$0xff]
      %v632 = vld [vmem:[#allocation2 + $0x18] sm:$0xff]
      %633 = vrot.lane.b32.xlu0 %v629, 17
      %v634 = vpop.permute.xlu0 %633
      %635 = vrot.lane.b32.xlu0 %v630, 17
      %v636 = vpop.permute.xlu0 %635
      %637 = vrot.lane.b32.xlu0 %v631, 17
      %v638 = vpop.permute.xlu0 %637
      %v639 = vsel %vm327, %v636, %v638
      %v640 = vsel %vm327, %v634, %v636
      %v641 = vsel %vm313, %v640, 0.0
      %v642 = vsel %vm314, %v639, 0.0
      %643 = vrot.lane.b32.xlu0 %v629, 16
      %v644 = vpop.permute.xlu0 %643
      %645 = vrot.lane.b32.xlu0 %v630, 16
      %v646 = vpop.permute.xlu0 %645
      %647 = vrot.lane.b32.xlu0 %v631, 16
      %v648 = vpop.permute.xlu0 %647
      %v649 = vsel %vm338, %v646, %v648
      %v650 = vsel %vm338, %v644, %v646
      %651 = vrot.lane.b32.xlu0 %v629, 15
      %v652 = vpop.permute.xlu0 %651
      %653 = vrot.lane.b32.xlu0 %v630, 15
      %v654 = vpop.permute.xlu0 %653
      %655 = vrot.lane.b32.xlu0 %v631, 15
      %v656 = vpop.permute.xlu0 %655
      %v657 = vsel %vm347, %v654, %v656
      %v658 = vsel %vm347, %v652, %v654
      %v659 = vsel %vm315, %v658, 0.0
      %v660 = vsel %vm316, %v657, 0.0
      %661 = vrot.lane.b32.xlu0 %v629, 1
      %v662 = vpop.permute.xlu0 %661
      %663 = vrot.lane.b32.xlu0 %v630, 1
      %v664 = vpop.permute.xlu0 %663
      %665 = vrot.lane.b32.xlu0 %v631, 1
      %v666 = vpop.permute.xlu0 %665
      %v667 = vsel %vm358, %v664, %v666
      %v668 = vsel %vm358, %v662, %v664
      %v669 = vsel %vm313, %v668, 0.0
      %v670 = vsel %vm314, %v667, 0.0
      %671 = vrot.lane.b32.xlu0 %v630, 127
      %v672 = vpop.permute.xlu0 %671
      %673 = vrot.lane.b32.xlu0 %v631, 127
      %v674 = vpop.permute.xlu0 %673
      %675 = vrot.lane.b32.xlu0 %v632, 127
      %v676 = vpop.permute.xlu0 %675
      %v677 = vsel %vm369, %v674, %v676
      %v678 = vsel %vm369, %v672, %v674
      %v679 = vsel %vm315, %v678, 0.0
      %v680 = vsel %vm316, %v677, 0.0
      %681 = vrot.lane.b32.xlu0 %v630, 113
      %v682 = vpop.permute.xlu0 %681
      %683 = vrot.lane.b32.xlu0 %v631, 113
      %v684 = vpop.permute.xlu0 %683
      %685 = vrot.lane.b32.xlu0 %v632, 113
      %v686 = vpop.permute.xlu0 %685
      %v687 = vsel %vm380, %v684, %v686
      %v688 = vsel %vm380, %v682, %v684
      %v689 = vsel %vm313, %v688, 0.0
      %v690 = vsel %vm314, %v687, 0.0
      %691 = vrot.lane.b32.xlu0 %v630, 112
      %v692 = vpop.permute.xlu0 %691
      %693 = vrot.lane.b32.xlu0 %v631, 112
      %v694 = vpop.permute.xlu0 %693
      %695 = vrot.lane.b32.xlu0 %v632, 112
      %v696 = vpop.permute.xlu0 %695
      %v697 = vsel %vm391, %v694, %v696
      %v698 = vsel %vm391, %v692, %v694
      %699 = vrot.lane.b32.xlu0 %v630, 111
      %v700 = vpop.permute.xlu0 %699
      %701 = vrot.lane.b32.xlu0 %v631, 111
      %v702 = vpop.permute.xlu0 %701
      %703 = vrot.lane.b32.xlu0 %v632, 111
      %v704 = vpop.permute.xlu0 %703
      %v705 = vsel %vm400, %v702, %v704
      %v706 = vsel %vm400, %v700, %v702
      %v707 = vsel %vm315, %v706, 0.0
      %v708 = vsel %vm316, %v705, 0.0
      %v709 = vpack.c.bf16 %v650, %v641
      %v710 = vpack.c.bf16 %v649, %v642
      %v711 = vpack.c.bf16 %v669, %v659
      %v712 = vpack.c.bf16 %v670, %v660
      %v713 = vpack.c.bf16 %v679, %v630
      %v714 = vpack.c.bf16 %v680, %v631
      %v715 = vpack.c.bf16 %v698, %v689
      %v716 = vpack.c.bf16 %v697, %v690
      %v717 = vpack.c.bf16 %v707, %v707
      %v718 = vpack.c.bf16 %v708, %v708
      %v719 = vld [vmem:[%s5] sm:$0xf]
      %v720 = vld [vmem:[%s6] sm:$0xff]
      %722 = vset.pattern.permute.xlu0 0
      %723 = vperm.xlu0 %722, %v720
      %v724 = vpop.permute.xlu0 %723
      %v727 = vsel %vm422, %v719, 0
      %v730 = vsel %vm426, %v717, 0
      %v733 = vsel %vm426, %v718, 0
      %735 = vmatprep.subr.bf16.mxu0 %v710
      %736 = vmatpush1.bf16.msra.mxu0 %v709
      %737 = vmatprep.subr.bf16.mxu0 %v712
      %738 = vmatpush1.bf16.msra.mxu0 %v711
      %739 = vmatprep.subr.bf16.mxu0 %v714
      %740 = vmatpush1.bf16.msra.mxu0 %v713
      %741 = vmatprep.subr.bf16.mxu0 %v716
      %742 = vmatpush1.bf16.msra.mxu0 %v715
      %743 = vmatprep.subr.bf16.mxu0 %v733
      %744 = vmatpush1.bf16.msra.mxu0 %v730
      %745 = vmatprep.subr.bf16.mxu0 0
      %746 = vmatpush1.bf16.msra.mxu0 0
      %747 = vmatprep.subr.bf16.mxu0 0
      %748 = vmatpush1.bf16.msra.mxu0 0
      %749 = vmatprep.subr.bf16.mxu0 0
      %750 = vmatpush1.bf16.msra.mxu0 0
      %751 = vmatprep.subr.bf16.mxu0 0
      %752 = vmatpush1.bf16.msra.mxu0 0
      %753 = vmatprep.subr.bf16.mxu0 0
      %754 = vmatpush1.bf16.msra.mxu0 0
      %755 = vmatprep.subr.bf16.mxu0 0
      %756 = vmatpush1.bf16.msra.mxu0 0
      %757 = vmatprep.subr.bf16.mxu0 0
      %758 = vmatpush1.bf16.msra.mxu0 0
      %759 = vmatprep.subr.bf16.mxu0 0
      %760 = vmatpush1.bf16.msra.mxu0 0
      %761 = vmatprep.subr.bf16.mxu0 0
      %762 = vmatpush1.bf16.msra.mxu0 0
      %763 = vmatprep.subr.bf16.mxu0 0
      %764 = vmatpush1.bf16.msra.mxu0 0
      %765 = vmatprep.subr.bf16.mxu0 0
      %766 = vmatpush1.bf16.msra.mxu0 0
      %767 = vmatprep.mubr.bf16.mxu0 0
      %768 = vmatmul.mubr.bf16.gmra.mrb[0].mxu0 %v727
      %v769 = vpop.f32.mrb[0].mxu0
      %v770 = vadd.f32 %v724, %v769
      %v771 = vpop.f32.mrb[0].mxu0
      %v772 = vadd.f32 %v724, %v771
      %v773 = vpop.f32.mrb[0].mxu0
      %v774 = vpop.f32.mrb[0].mxu0
      %775 = vdwg.mxu0
      %v776 = vmax.f32 %v770, 0.0
      %v777 = vmax.f32 %v772, 0.0
      %778 = vst [vmem:[%s278] sm:$0xff] %v776
      %779 = vst [vmem:[%s278 + $0x8] sm:$0xff] %v777
      %p780 = scmp.lt.s32.totalorder %s18, 1
      %s781 = scalar_select %p780, %s18, 1
      %s782 = smul.addr %s781, 2
      %s783 = smul.addr %s782, 8
      %s784 = scalar_lea.vmem %s7, %s783
      // Predicated region
      $region49: #{_lambda_.1} parent=47 // pred_check
        %p785 = pneg %p188
      $region50: #{_lambda_.1} parent=47 // pred_check_branch
        %787 = sbr.rel (%p785) target = $region52
      $region51: #{_lambda_.1} parent=47 // pred_region
        _
      $region52: #{_lambda_.1} parent=47 // pred_fallthru
        _
    $region48: #{_lambda_.1} parent=5 // pred_fallthru
      _
    %p788 = scmp.le.s32.totalorder 2, %s13
    // Predicated region
    $region53: #{_lambda_.1} parent=5 // pred_check
      %p789 = pneg %p788
    $region54: #{_lambda_.1} parent=5 // pred_check_branch
      %791 = sbr.rel (%p789) target = $region56
    $region55: #{_lambda_.1} parent=5 // pred_region
      %s792 = ssub.s32 %s13, 2
      // Predicated region
      $region57: #{_lambda_.1} parent=55 // pred_check
        %p793 = pneg %p194
      $region58: #{_lambda_.1} parent=55 // pred_check_branch
        %795 = sbr.rel (%p793) target = $region60
      $region59: #{_lambda_.1} parent=55 // pred_region
        %p796 = scmp.lt.s32.totalorder %s19, 1
        %s797 = scalar_select %p796, %s19, 1
        %s798 = smul.addr %s797, 2
        %s799 = smul.addr %s798, 8
        %s800 = scalar_lea.vmem %s7, %s799
      $region60: #{_lambda_.1} parent=55 // pred_fallthru
        _
    $region56: #{_lambda_.1} parent=5 // pred_fallthru
      _
  $region6: #{_lambda_.1} parent=0 // loop_footer
    %s17 = sadd.s32 1, %s13
  $region7: #{_lambda_.1} parent=0 // loop_footer_branch
    %12 = sbr.rel target = $region3
  $region8: #{_lambda_.1} parent=0 // loop_exit
    _

</llo_original>
